<compile_context>
chip_gen: v7x
topology: tpu7x:2x2x1
jax: 0.10.0
libtpu: 0.0.40
codegen_flags: <defaults>
</compile_context>

<pallas_src>
import math

import jax
import jax.numpy as jnp
from jax.experimental import pallas as pl
from jax.experimental.pallas import tpu as pltpu


def _round_up(x, m):
    return ((x + m - 1) // m) * m


# ----------------------------- Pallas kernel -------------------------------


def _prenet_kernel(x_ref, w1_ref, b1_ref, w2_ref, b2_ref, o_ref):
    """Fused relu(x@W1+b1) -> relu(.@W2+b2)  (dropout = identity in eval mode).

    x_ref : (TR, D_in) f32/bf16  activation row tile (native dtype streamed)
    w1_ref: (D_in, H)  bf16      resident weight
    b1_ref: (1, H)     f32
    w2_ref: (H, O)     bf16      resident weight
    b2_ref: (1, O)     f32
    o_ref : (TR, O)    f32/bf16
    """
    x = x_ref[...].astype(jnp.bfloat16)
    h = jnp.dot(x, w1_ref[...], preferred_element_type=jnp.float32) + b1_ref[...]
    h = jnp.maximum(h, 0.0)
    # TODO(synk): training-mode dropout would go here (pltpu.prng_seed +
    # pltpu.prng_random_bits mask, p=0.5, scale by 2).
    y = jnp.dot(h.astype(jnp.bfloat16), w2_ref[...],
                preferred_element_type=jnp.float32) + b2_ref[...]
    o_ref[...] = jnp.maximum(y, 0.0).astype(o_ref.dtype)


# ------------------------------- wrapper ------------------------------------


def decoder_prenet(x, params, *, block_rows=1024, out_dtype=None):
    """x: (..., xsize) -> (..., output_size). Single fused pallas_call.

    out_dtype=None keeps x.dtype (PyTorch f32 parity); pass jnp.bfloat16 to
    halve output HBM traffic when downstream consumes bf16.
    """
    w1 = params["w1"].astype(jnp.bfloat16)                  # (xsize, hidden)
    w2 = params["w2"].astype(jnp.bfloat16)                  # (hidden, output)
    b1 = params["b1"].reshape(1, -1).astype(jnp.float32)    # (1, hidden)
    b2 = params["b2"].reshape(1, -1).astype(jnp.float32)    # (1, output)
    D_in, H = w1.shape
    O = w2.shape[1]
    out_dtype = x.dtype if out_dtype is None else out_dtype

    lead = x.shape[:-1]
    R = math.prod(lead) if lead else 1
    x2 = x.reshape(R, D_in)  # native dtype; kernel casts to bf16 for the MXU

    # Row tile: large (amortize per-step overhead), multiple of 16 sublanes
    # (safe for bf16 (16,128) native tiling too), and <= ceil(R/2) so the grid
    # has >= 2 steps whenever R > 16 (keeps v7x's second TensorCore busy).
    tr = _round_up(max(16, min(block_rows, -(-R // 2))), 16)
    grid = (pl.cdiv(R, tr),)  # partial last block: OOB output rows are masked

    # Advisory cost estimate so XLA schedules/overlaps around the custom call.
    flops = 2 * R * (D_in * H + H * O)
    bytes_accessed = (R * D_in * x2.dtype.itemsize
                      + R * O * jnp.dtype(out_dtype).itemsize
                      + (w1.size + w2.size) * 2 + (b1.size + b2.size) * 4)

    out = pl.pallas_call(
        _prenet_kernel,
        out_shape=jax.ShapeDtypeStruct((R, O), out_dtype),
        grid_spec=pltpu.PrefetchScalarGridSpec(
            num_scalar_prefetch=0,
            grid=grid,
            in_specs=[
                pl.BlockSpec((tr, D_in), lambda r: (r, 0)),    # streamed rows
                pl.BlockSpec((D_in, H), lambda r: (0, 0)),     # resident W1
                pl.BlockSpec((1, H), lambda r: (0, 0)),        # resident b1
                pl.BlockSpec((H, O), lambda r: (0, 0)),        # resident W2
                pl.BlockSpec((1, O), lambda r: (0, 0)),        # resident b2
            ],
            out_specs=pl.BlockSpec((tr, O), lambda r: (r, 0)),
        ),
        compiler_params=pltpu.CompilerParams(
            dimension_semantics=("parallel",),
            vmem_limit_bytes=32 * 1024 * 1024,
        ),
        cost_estimate=pl.CostEstimate(
            flops=flops, transcendentals=0, bytes_accessed=bytes_accessed),
    )(x2, w1, b1, w2, b2)

    return out.reshape(lead + (O,))


# ------------------------------ references ----------------------------------


def decoder_prenet_ref_bf16(x, params):
    """Mirrors the kernel's bf16-operand / f32-accumulate math (tight check)."""
    w1 = params["w1"].astype(jnp.bfloat16)
    w2 = params["w2"].astype(jnp.bfloat16)
    h = jnp.dot(x.astype(jnp.bfloat16), w1,
                preferred_element_type=jnp.float32) + params["b1"]
    h = jnp.maximum(h, 0.0)
    y = jnp.dot(h.astype(jnp.bfloat16), w2,
                preferred_element_type=jnp.float32) + params["b2"]
    return jnp.maximum(y, 0.0)


def decoder_prenet_ref_f32(x, params):
    """Full-f32 PyTorch-parity reference (loose check; bf16 MXU documented)."""
    h = jnp.maximum(
        jnp.dot(x, params["w1"], precision=jax.lax.Precision.HIGHEST)
        + params["b1"], 0.0)
    y = jnp.maximum(
        jnp.dot(h, params["w2"], precision=jax.lax.Precision.HIGHEST)
        + params["b2"], 0.0)
    return y


# ------------------------------ parameters ----------------------------------


def init_params(key, xsize, hidden_size, output_size):
    k1, k2, k3, k4 = jax.random.split(key, 4)
    # LinearNorm ~ nn.Linear with xavier-style init; stored input-major: y = x @ W + b.
    s1 = (2.0 / (xsize + hidden_size)) ** 0.5
    s2 = (2.0 / (hidden_size + output_size)) ** 0.5
    return {
        "w1": s1 * jax.random.normal(k1, (xsize, hidden_size), jnp.float32),
        "b1": 0.05 * jax.random.normal(k2, (hidden_size,), jnp.float32),
        "w2": s2 * jax.random.normal(k3, (hidden_size, output_size), jnp.float32),
        "b2": 0.05 * jax.random.normal(k4, (output_size,), jnp.float32),
    }


# --------------------------------- main --------------------------------------


if __name__ == "__main__":
    XSIZE = 80          # e.g. n_mels
    HIDDEN = 256        # lane-dense (>= 128)
    OUTPUT = 256        # lane-dense (>= 128)
    B, T = 2, 16

    key = jax.random.PRNGKey(0)
    k_x, k_p, k_x2 = jax.random.split(key, 3)
    x = jax.random.normal(k_x, (B, T, XSIZE), jnp.float32)
    params = init_params(k_p, XSIZE, HIDDEN, OUTPUT)

    # --- Test 1: f32 I/O, R a multiple of the row tile (grid = 2) -----------
    out = jax.block_until_ready(decoder_prenet(x, params))
    ref_bf16 = jax.block_until_ready(decoder_prenet_ref_bf16(x, params))
    ref_f32 = jax.block_until_ready(decoder_prenet_ref_f32(x, params))

    assert out.shape == (B, T, OUTPUT), out.shape
    assert out.dtype == jnp.float32, out.dtype
    # Tight check vs. a reference that mirrors the kernel's bf16-MXU math.
    assert jnp.allclose(out, ref_bf16, atol=1e-3, rtol=1e-3), float(
        jnp.max(jnp.abs(out - ref_bf16)))
    # Loose parity check vs. pure-f32 PyTorch semantics (bf16 MXU operands by design).
    assert jnp.allclose(out, ref_f32, atol=6e-2, rtol=6e-2), float(
        jnp.max(jnp.abs(out - ref_f32)))

    # --- Test 2: bf16 streaming + bf16 output + ragged tail (R % tr != 0) ---
    T2 = 19                                             # R=38 -> tr=32, partial last block
    x_b = jax.random.normal(k_x2, (B, T2, XSIZE), jnp.float32).astype(jnp.bfloat16)
    out_b = jax.block_until_ready(
        decoder_prenet(x_b, params, out_dtype=jnp.bfloat16))
    ref_b = jax.block_until_ready(
        decoder_prenet_ref_bf16(x_b.astype(jnp.float32), params))

    assert out_b.shape == (B, T2, OUTPUT), out_b.shape
    assert out_b.dtype == jnp.bfloat16, out_b.dtype
    assert jnp.allclose(out_b.astype(jnp.float32), ref_b, atol=3e-2, rtol=3e-2), float(
        jnp.max(jnp.abs(out_b.astype(jnp.float32) - ref_b)))

    print("KERNEL_OK")
</pallas_src>

<mosaic_0001>
module attributes {stable_mosaic.version = 11 : i64} {
  func.func @_prenet_kernel(%arg0: i32, %arg1: memref<16x80xf32, #tpu.memory_space<vmem>>, %arg2: memref<80x256xbf16, #tpu.memory_space<vmem>>, %arg3: memref<1x256xf32, #tpu.memory_space<vmem>>, %arg4: memref<256x256xbf16, #tpu.memory_space<vmem>>, %arg5: memref<1x256xf32, #tpu.memory_space<vmem>>, %arg6: memref<16x256xf32, #tpu.memory_space<vmem>>) attributes {dimension_semantics = [#tpu.dimension_semantics<parallel>], iteration_bounds = array<i64: 2>, scalar_prefetch = 0 : i64, scratch_operands = 0 : i64, tpu.core_type = #tpu.core_type<tc>, window_params = [{transform_indices = @transform_0, window_bounds = array<i64: 16, 80>}, {pipeline_mode = #tpu.pipeline_mode<synchronous>, transform_indices = @transform_1, window_bounds = array<i64: 80, 256>}, {pipeline_mode = #tpu.pipeline_mode<synchronous>, transform_indices = @transform_2, window_bounds = array<i64: 1, 256>}, {pipeline_mode = #tpu.pipeline_mode<synchronous>, transform_indices = @transform_3, window_bounds = array<i64: 256, 256>}, {pipeline_mode = #tpu.pipeline_mode<synchronous>, transform_indices = @transform_4, window_bounds = array<i64: 1, 256>}, {transform_indices = @transform_5, window_bounds = array<i64: 16, 256>}]} {
    %c0 = arith.constant 0 : index
    %c0_0 = arith.constant 0 : index
    %0 = vector.load %arg1[%c0, %c0_0] : memref<16x80xf32, #tpu.memory_space<vmem>>, vector<16x80xf32>
    %1 = arith.truncf %0 : vector<16x80xf32> to vector<16x80xbf16>
    %c0_1 = arith.constant 0 : index
    %c0_2 = arith.constant 0 : index
    %2 = vector.load %arg2[%c0_1, %c0_2] : memref<80x256xbf16, #tpu.memory_space<vmem>>, vector<80x256xbf16>
    %cst = arith.constant dense<0.000000e+00> : vector<16x256xf32>
    %3 = tpu.matmul %1, %2, %cst {dimension_numbers = #tpu.dot_dimension_numbers<[1], [0], [0], [1], [0, 0, 1, 1], [], []>} : vector<16x80xbf16>, vector<80x256xbf16>, vector<16x256xf32> -> vector<16x256xf32>
    %c0_3 = arith.constant 0 : index
    %c0_4 = arith.constant 0 : index
    %4 = vector.load %arg3[%c0_3, %c0_4] : memref<1x256xf32, #tpu.memory_space<vmem>>, vector<1x256xf32>
    %5 = vector.broadcast %4 : vector<1x256xf32> to vector<16x256xf32>
    %6 = arith.addf %3, %5 : vector<16x256xf32>
    %cst_5 = arith.constant 0.000000e+00 : f32
    %7 = vector.broadcast %cst_5 : f32 to vector<16x256xf32>
    %8 = arith.maximumf %6, %7 : vector<16x256xf32>
    %9 = arith.truncf %8 : vector<16x256xf32> to vector<16x256xbf16>
    %c0_6 = arith.constant 0 : index
    %c0_7 = arith.constant 0 : index
    %10 = vector.load %arg4[%c0_6, %c0_7] : memref<256x256xbf16, #tpu.memory_space<vmem>>, vector<256x256xbf16>
    %cst_8 = arith.constant dense<0.000000e+00> : vector<16x256xf32>
    %11 = tpu.matmul %9, %10, %cst_8 {dimension_numbers = #tpu.dot_dimension_numbers<[1], [0], [0], [1], [0, 0, 1, 1], [], []>} : vector<16x256xbf16>, vector<256x256xbf16>, vector<16x256xf32> -> vector<16x256xf32>
    %c0_9 = arith.constant 0 : index
    %c0_10 = arith.constant 0 : index
    %12 = vector.load %arg5[%c0_9, %c0_10] : memref<1x256xf32, #tpu.memory_space<vmem>>, vector<1x256xf32>
    %13 = vector.broadcast %12 : vector<1x256xf32> to vector<16x256xf32>
    %14 = arith.addf %11, %13 : vector<16x256xf32>
    %cst_11 = arith.constant 0.000000e+00 : f32
    %15 = vector.broadcast %cst_11 : f32 to vector<16x256xf32>
    %16 = arith.maximumf %14, %15 : vector<16x256xf32>
    %c0_12 = arith.constant 0 : index
    %c0_13 = arith.constant 0 : index
    %17 = vector.load %arg6[%c0_12, %c0_13] : memref<16x256xf32, #tpu.memory_space<vmem>>, vector<16x256xf32>
    tpu.vector_store %arg6[%c0_12, %c0_13], %16 {strides = array<i32>} : memref<16x256xf32, #tpu.memory_space<vmem>>, vector<16x256xf32>,
    return
  }
  func.func @transform_0(%arg0: i32) -> (i32, i32) {
    %c0_i32 = arith.constant 0 : i32
    %c0_i32_0 = arith.constant 0 : i32
    return %arg0, %c0_i32 : i32, i32
  }
  func.func @transform_1(%arg0: i32) -> (i32, i32) {
    %c0_i32 = arith.constant 0 : i32
    %c0_i32_0 = arith.constant 0 : i32
    %c0_i32_1 = arith.constant 0 : i32
    return %c0_i32, %c0_i32_0 : i32, i32
  }
  func.func @transform_2(%arg0: i32) -> (i32, i32) {
    %c0_i32 = arith.constant 0 : i32
    %c0_i32_0 = arith.constant 0 : i32
    %c0_i32_1 = arith.constant 0 : i32
    return %c0_i32, %c0_i32_0 : i32, i32
  }
  func.func @transform_3(%arg0: i32) -> (i32, i32) {
    %c0_i32 = arith.constant 0 : i32
    %c0_i32_0 = arith.constant 0 : i32
    %c0_i32_1 = arith.constant 0 : i32
    return %c0_i32, %c0_i32_0 : i32, i32
  }
  func.func @transform_4(%arg0: i32) -> (i32, i32) {
    %c0_i32 = arith.constant 0 : i32
    %c0_i32_0 = arith.constant 0 : i32
    %c0_i32_1 = arith.constant 0 : i32
    return %c0_i32, %c0_i32_0 : i32, i32
  }
  func.func @transform_5(%arg0: i32) -> (i32, i32) {
    %c0_i32 = arith.constant 0 : i32
    %c0_i32_0 = arith.constant 0 : i32
    return %arg0, %c0_i32 : i32, i32
  }
}

</mosaic_0001>

<llo_original>
// kernel: tpu_custom_call.1
$region0: #{tpu_custom_call.1}
  #allocation0 [shape = 'u32[]', space=smem, size = 0x4, offset = 0x4, fixed_abs, tag = 'smem constant byte address 0x4 - core index']
  #allocation1 [shape = 'u32[144,128]{1,0:T(1,128)}', space=vmem, size = 0x12000, scoped, tag = 'internal scratch']
  %s0 = inlined_call_operand.hbm [shape: f32[32,80], index: 0, kind: input, shape index: {}]
  %s1 = inlined_call_operand.hbm [shape: bf16[80,256], index: 1, kind: input, shape index: {}]
  %s2 = inlined_call_operand.vmem [shape: f32[1,256], index: 2, kind: input, shape index: {}]
  %s3 = inlined_call_operand.hbm [shape: bf16[256,256], index: 3, kind: input, shape index: {}]
  %s4 = inlined_call_operand.vmem [shape: f32[1,256], index: 4, kind: input, shape index: {}]
  %s5 = inlined_call_operand.hbm [shape: f32[32,256], index: 5, kind: output, shape index: {}]
  %s6 = sld [smem:[#allocation0]]
  $region65: #{tpu_custom_call.1} parent=0
    _
  %s8 = ssub.s32 1, %s6
  %s9 = scalar_select 0, %s8, %s6
  $region1: #{tpu_custom_call.1} parent=0
    #allocation2 [shape = 'u8[16384]{0}', space=vmem, size = 0x4000, scoped, tag = 'input window, operand 0']
    #allocation3 [shape = 's32[2]{0}', space=sflag, size = 0x8, scoped, tag = 'scoped memory for tpu_custom_call.1']
    #allocation4 [shape = 's32[2]{0}', space=sflag, size = 0x8, scoped, tag = 'scoped memory for tpu_custom_call.1']
    #allocation5 [shape = 'u8[40960]{0}', space=vmem, size = 0xa000, scoped, tag = 'input window, operand 1, single buffered']
    #allocation6 [shape = 's32[1]{0}', space=sflag, size = 0x4, scoped, tag = 'scoped memory for tpu_custom_call.1']
    #allocation7 [shape = 'u8[131072]{0}', space=vmem, size = 0x20000, scoped, tag = 'input window, operand 3, single buffered']
    #allocation8 [shape = 'u8[32768]{0}', space=vmem, size = 0x8000, scoped, tag = 'output window, operand 0']
    %10 = vsyncpa [#allocation3], 0
    %s11 = scalar_lea.sflag [#allocation3], 1
    %12 = vsyncpa %s11, 0
    %13 = vsyncpa [#allocation6], 0
    %14 = vsyncpa [#allocation4], 0
    %s15 = scalar_lea.sflag [#allocation4], 1
    %16 = vsyncpa %s15, 0
    loop: start=0, step=1, limit=4
    $region2: #{tpu_custom_call.1} parent=1 // loop_pre_header
      _
    $region3: #{tpu_custom_call.1} parent=1 // loop_header
      %s18 = sphi 0, %s22
      %p19 = scmp.ge.s32.totalorder %s18, 4
      %s28 = sphi 0, %s30
      %s31 = sphi 0, %s28
      %s32 = sphi 0, %s31
      %s48 = sphi 0, %s32
      %s52 = sphi 0, %s52
      %s54 = sphi 0, %s52
      %s55 = sphi 0, %s54
      %s69 = sphi 0, %s55
      %s73 = sphi 0, %s73
      %s75 = sphi 0, %s73
      %s76 = sphi 0, %s75
      %s90 = sphi 0, %s76
      %s94 = sphi 0, %s94
      %s96 = sphi 0, %s94
      %s97 = sphi 0, %s96
      %s111 = sphi 0, %s97
      %s115 = sphi 0, %s115
      %s117 = sphi 0, %s115
      %s118 = sphi 0, %s117
      %s132 = sphi 0, %s118
      %s138 = sphi 0, %s140
      %s141 = sphi 0, %s138
      %s142 = sphi 0, %s141
      %s158 = sphi 0, %s142
    $region4: #{tpu_custom_call.1} parent=1 // loop_header_branch
      %21 = sbr.rel (%p19) target = $region8
    $region5: #{tpu_custom_call.1} parent=1 // loop_body
      %s23 = ssub.s32 %s18, 1
      %s24 = ssub.s32 %s18, 2
      %s25 = sadd.s32 %s18, 1
      %s26 = ssub.s32 %s18, %s25
      %p27 = scmp.eq.s32.totalorder %s26, 0
      %s29 = sadd.s32 %s28, 1
      %s30 = scalar_select %p27, %s28, %s29
      %p33 = pneg %p27
      %p34 = scmp.eq.s32.totalorder %s18, 1
      %p35 = por %p33, %p34
      %p36 = scmp.ne.s32.totalorder %s28, %s31
      %p37 = scmp.eq.s32.totalorder %s18, 0
      %p38 = por %p36, %p37
      %p39 = scmp.ne.s32.totalorder %s28, %s31
      %p40 = scmp.eq.s32.totalorder %s23, 1
      %p41 = por %p39, %p40
      %p42 = scmp.ne.s32.totalorder %s31, %s32
      %p43 = scmp.eq.s32.totalorder %s23, 0
      %p44 = por %p42, %p43
      %p45 = scmp.ne.s32.totalorder %s31, %s32
      %p46 = scmp.eq.s32.totalorder %s24, 1
      %p47 = por %p45, %p46
      %p49 = scmp.ne.s32.totalorder %s32, %s48
      %p50 = scmp.eq.s32.totalorder %s24, 0
      %p51 = por %p49, %p50
      %s53 = sadd.s32 %s52, 1
      %p56 = scmp.eq.s32.totalorder %s18, 1
      %p57 = scmp.ne.s32.totalorder %s52, %s54
      %p58 = scmp.eq.s32.totalorder %s18, 0
      %p59 = por %p57, %p58
      %p60 = scmp.ne.s32.totalorder %s52, %s54
      %p61 = scmp.eq.s32.totalorder %s23, 1
      %p62 = por %p60, %p61
      %p63 = scmp.ne.s32.totalorder %s54, %s55
      %p64 = scmp.eq.s32.totalorder %s23, 0
      %p65 = por %p63, %p64
      %p66 = scmp.ne.s32.totalorder %s54, %s55
      %p67 = scmp.eq.s32.totalorder %s24, 1
      %p68 = por %p66, %p67
      %p70 = scmp.ne.s32.totalorder %s55, %s69
      %p71 = scmp.eq.s32.totalorder %s24, 0
      %p72 = por %p70, %p71
      %s74 = sadd.s32 %s73, 1
      %p77 = scmp.eq.s32.totalorder %s18, 1
      %p78 = scmp.ne.s32.totalorder %s73, %s75
      %p79 = scmp.eq.s32.totalorder %s18, 0
      %p80 = por %p78, %p79
      %p81 = scmp.ne.s32.totalorder %s73, %s75
      %p82 = scmp.eq.s32.totalorder %s23, 1
      %p83 = por %p81, %p82
      %p84 = scmp.ne.s32.totalorder %s75, %s76
      %p85 = scmp.eq.s32.totalorder %s23, 0
      %p86 = por %p84, %p85
      %p87 = scmp.ne.s32.totalorder %s75, %s76
      %p88 = scmp.eq.s32.totalorder %s24, 1
      %p89 = por %p87, %p88
      %p91 = scmp.ne.s32.totalorder %s76, %s90
      %p92 = scmp.eq.s32.totalorder %s24, 0
      %p93 = por %p91, %p92
      %s95 = sadd.s32 %s94, 1
      %p98 = scmp.eq.s32.totalorder %s18, 1
      %p99 = scmp.ne.s32.totalorder %s94, %s96
      %p100 = scmp.eq.s32.totalorder %s18, 0
      %p101 = por %p99, %p100
      %p102 = scmp.ne.s32.totalorder %s94, %s96
      %p103 = scmp.eq.s32.totalorder %s23, 1
      %p104 = por %p102, %p103
      %p105 = scmp.ne.s32.totalorder %s96, %s97
      %p106 = scmp.eq.s32.totalorder %s23, 0
      %p107 = por %p105, %p106
      %p108 = scmp.ne.s32.totalorder %s96, %s97
      %p109 = scmp.eq.s32.totalorder %s24, 1
      %p110 = por %p108, %p109
      %p112 = scmp.ne.s32.totalorder %s97, %s111
      %p113 = scmp.eq.s32.totalorder %s24, 0
      %p114 = por %p112, %p113
      %s116 = sadd.s32 %s115, 1
      %p119 = scmp.eq.s32.totalorder %s18, 1
      %p120 = scmp.ne.s32.totalorder %s115, %s117
      %p121 = scmp.eq.s32.totalorder %s18, 0
      %p122 = por %p120, %p121
      %p123 = scmp.ne.s32.totalorder %s115, %s117
      %p124 = scmp.eq.s32.totalorder %s23, 1
      %p125 = por %p123, %p124
      %p126 = scmp.ne.s32.totalorder %s117, %s118
      %p127 = scmp.eq.s32.totalorder %s23, 0
      %p128 = por %p126, %p127
      %p129 = scmp.ne.s32.totalorder %s117, %s118
      %p130 = scmp.eq.s32.totalorder %s24, 1
      %p131 = por %p129, %p130
      %p133 = scmp.ne.s32.totalorder %s118, %s132
      %p134 = scmp.eq.s32.totalorder %s24, 0
      %p135 = por %p133, %p134
      %s136 = ssub.s32 %s18, %s25
      %p137 = scmp.eq.s32.totalorder %s136, 0
      %s139 = sadd.s32 %s138, 1
      %s140 = scalar_select %p137, %s138, %s139
      %p143 = pneg %p137
      %p144 = scmp.eq.s32.totalorder %s18, 1
      %p145 = por %p143, %p144
      %p146 = scmp.ne.s32.totalorder %s138, %s141
      %p147 = scmp.eq.s32.totalorder %s18, 0
      %p148 = por %p146, %p147
      %p149 = scmp.ne.s32.totalorder %s138, %s141
      %p150 = scmp.eq.s32.totalorder %s23, 1
      %p151 = por %p149, %p150
      %p152 = scmp.ne.s32.totalorder %s141, %s142
      %p153 = scmp.eq.s32.totalorder %s23, 0
      %p154 = por %p152, %p153
      %p155 = scmp.ne.s32.totalorder %s141, %s142
      %p156 = scmp.eq.s32.totalorder %s24, 1
      %p157 = por %p155, %p156
      %p159 = scmp.ne.s32.totalorder %s142, %s158
      %p160 = scmp.eq.s32.totalorder %s24, 0
      %p161 = por %p159, %p160
      %p162 = scmp.le.s32.totalorder 1, %s18
      %p163 = scmp.lt.s32.totalorder %s18, 3
      %p164 = pnand %p162, %p163
      %p165 = pneg %p164
      // Predicated region
      $region9: #{tpu_custom_call.1} parent=5 // pred_check
        _
      $region10: #{tpu_custom_call.1} parent=5 // pred_check_branch
        %167 = sbr.rel (%p164) target = $region12
      $region11: #{tpu_custom_call.1} parent=5 // pred_region
        %s168 = ssub.s32 %s18, 1
        // Predicated region
        $region13: #{tpu_custom_call.1} parent=11 // pred_check
          %p169 = pneg %p65
        $region14: #{tpu_custom_call.1} parent=11 // pred_check_branch
          %171 = sbr.rel (%p169) target = $region16
        $region15: #{tpu_custom_call.1} parent=11 // pred_region
          %s173 = ssub.s32 1280, 1280
          %174 = vsyncadd [#allocation6], %s173
          %s175 = sshll.u32 [#allocation5], 4
          %s176 = int_to_ptr.vmem [resolvable:$true] %s175
          %181 = dma.hbm_to_vmem [thread:$0]  %s1, 1280, %s176, [#allocation6], 128, 128, 8
        $region16: #{tpu_custom_call.1} parent=11 // pred_fallthru
          _
        // Predicated region
        $region17: #{tpu_custom_call.1} parent=11 // pred_check
          %p182 = pneg %p86
        $region18: #{tpu_custom_call.1} parent=11 // pred_check_branch
          %184 = sbr.rel (%p182) target = $region20
        $region19: #{tpu_custom_call.1} parent=11 // pred_region
          _
        $region20: #{tpu_custom_call.1} parent=11 // pred_fallthru
          _
        // Predicated region
        $region21: #{tpu_custom_call.1} parent=11 // pred_check
          %p185 = pneg %p107
        $region22: #{tpu_custom_call.1} parent=11 // pred_check_branch
          %187 = sbr.rel (%p185) target = $region24
        $region23: #{tpu_custom_call.1} parent=11 // pred_region
          %s189 = ssub.s32 4096, 4096
          %190 = vsyncadd [#allocation6], %s189
          %s191 = sshll.u32 [#allocation7], 4
          %s192 = int_to_ptr.vmem [resolvable:$true] %s191
          %197 = dma.hbm_to_vmem [thread:$0]  %s3, 4096, %s192, [#allocation6], 128, 128, 8
        $region24: #{tpu_custom_call.1} parent=11 // pred_fallthru
          _
        // Predicated region
        $region25: #{tpu_custom_call.1} parent=11 // pred_check
          %p198 = pneg %p128
        $region26: #{tpu_custom_call.1} parent=11 // pred_check_branch
          %200 = sbr.rel (%p198) target = $region28
        $region27: #{tpu_custom_call.1} parent=11 // pred_region
          _
        $region28: #{tpu_custom_call.1} parent=11 // pred_fallthru
          _
      $region12: #{tpu_custom_call.1} parent=5 // pred_fallthru
        _
      %p201 = scmp.lt.s32.totalorder %s18, 2
      // Predicated region
      $region29: #{tpu_custom_call.1} parent=5 // pred_check
        %p202 = pneg %p201
      $region30: #{tpu_custom_call.1} parent=5 // pred_check_branch
        %204 = sbr.rel (%p202) target = $region32
      $region31: #{tpu_custom_call.1} parent=5 // pred_region
        // Predicated region
        $region33: #{tpu_custom_call.1} parent=31 // pred_check
          %p205 = pneg %p38
        $region34: #{tpu_custom_call.1} parent=31 // pred_check_branch
          %207 = sbr.rel (%p205) target = $region36
        $region35: #{tpu_custom_call.1} parent=31 // pred_region
          %s208 = sand.u32 %s28, 1
          %s209 = scalar_lea.sflag [#allocation3], %s208
          %s210 = sand.u32 %s28, 1
          %s211 = smul.addr %s210, 16
          %s212 = scalar_lea.vmem [#allocation2], %s211
          %s213 = smul.u32 2, %s18
          %s215 = ssub.s32 256, 256
          %216 = vsyncadd %s209, %s215
          %s217 = smul.addr %s213, 128
          %s218 = scalar_lea.hbm %s0, %s217
          %s219 = sshll.u32 %s212, 4
          %s220 = int_to_ptr.vmem [resolvable:$true] %s219
          %225 = dma.hbm_to_vmem [thread:$0]  %s218, 256, %s220, %s209, 128, 128, 8
        $region36: #{tpu_custom_call.1} parent=31 // pred_fallthru
          _
      $region32: #{tpu_custom_call.1} parent=5 // pred_fallthru
        _
      %p226 = scmp.le.s32.totalorder 1, %s18
      %p227 = scmp.lt.s32.totalorder %s18, 3
      %p228 = pnand %p226, %p227
      %p229 = pneg %p228
      // Predicated region
      $region37: #{tpu_custom_call.1} parent=5 // pred_check
        _
      $region38: #{tpu_custom_call.1} parent=5 // pred_check_branch
        %231 = sbr.rel (%p228) target = $region40
      $region39: #{tpu_custom_call.1} parent=5 // pred_region
        %s232 = ssub.s32 %s18, 1
        %s233 = sand.u32 %s31, 1
        %s234 = scalar_lea.sflag [#allocation3], %s233
        %s235 = sand.u32 %s31, 1
        %s236 = smul.addr %s235, 16
        %s237 = scalar_lea.vmem [#allocation2], %s236
        // Predicated region
        $region41: #{tpu_custom_call.1} parent=39 // pred_check
          %p238 = pneg %p44
        $region42: #{tpu_custom_call.1} parent=39 // pred_check_branch
          %240 = sbr.rel (%p238) target = $region44
        $region43: #{tpu_custom_call.1} parent=39 // pred_region
          %241 = dma.done %s234, 256
        $region44: #{tpu_custom_call.1} parent=39 // pred_fallthru
          _
        // Predicated region
        $region45: #{tpu_custom_call.1} parent=39 // pred_check
          %p242 = pneg %p65
        $region46: #{tpu_custom_call.1} parent=39 // pred_check_branch
          %244 = sbr.rel (%p242) target = $region48
        $region47: #{tpu_custom_call.1} parent=39 // pred_region
          %245 = dma.done [#allocation6], 1280
        $region48: #{tpu_custom_call.1} parent=39 // pred_fallthru
          _
        // Predicated region
        $region49: #{tpu_custom_call.1} parent=39 // pred_check
          %p246 = pneg %p107
        $region50: #{tpu_custom_call.1} parent=39 // pred_check_branch
          %248 = sbr.rel (%p246) target = $region52
        $region51: #{tpu_custom_call.1} parent=39 // pred_region
          %249 = dma.done [#allocation6], 4096
        $region52: #{tpu_custom_call.1} parent=39 // pred_fallthru
          _
        %s250 = sand.u32 %s31, 1
        %s251 = scalar_lea.sflag [#allocation3], %s250
        %s252 = sand.u32 %s31, 1
        %s253 = smul.addr %s252, 16
        %s254 = scalar_lea.vmem [#allocation2], %s253
        %p255 = pneg %p44
        %p256 = pneg %p41
        %p257 = pneg %p65
        %p258 = pneg %p62
        %p259 = pneg %p86
        %p260 = pneg %p83
        %p261 = pneg %p107
        %p262 = pneg %p104
        %p263 = pneg %p128
        %p264 = pneg %p125
        %p265 = pneg %p154
        %p266 = pneg %p151
        %s267 = sand.u32 %s141, 1
        %s268 = scalar_lea.sflag [#allocation4], %s267
        %s269 = sand.u32 %s141, 1
        %s270 = smul.addr %s269, 32
        %s271 = scalar_lea.vmem [#allocation8], %s270
        %s272 = smul.u32 2, %s23
        %s273 = smul.u32 2, %s23
        %v275 = vld [vmem:[%s237] sm:$0xff]
        %v276 = vld [vmem:[%s237 + $0x8] sm:$0xff]
        %v277 = vpack.c.bf16 %v276, %v275
        %v278 = vld [vmem:[#allocation5] sm:$0xff]
        %v279 = vld [vmem:[#allocation5 + $0x8] sm:$0xff]
        %v280 = vld [vmem:[#allocation5 + $0x10] sm:$0xff]
        %v281 = vld [vmem:[#allocation5 + $0x18] sm:$0xff]
        %v282 = vld [vmem:[#allocation5 + $0x20] sm:$0xff]
        %v283 = vld [vmem:[#allocation5 + $0x28] sm:$0xff]
        %v284 = vld [vmem:[#allocation5 + $0x30] sm:$0xff]
        %v285 = vld [vmem:[#allocation5 + $0x38] sm:$0xff]
        %v286 = vld [vmem:[#allocation5 + $0x40] sm:$0xff]
        %v287 = vld [vmem:[#allocation5 + $0x48] sm:$0xff]
        %v288 = vld [vmem:[%s2] sm:$0x3]
        %v290 = vlaneseq
        %v291 = vshrl.u32 %v290, 7
        %v292 = vsub.s32 0, %v291
        %v293 = vrot.slane %v288, %v292
        %v294 = vlaneseq
        %v295 = vshrl.u32 %v294, 7
        %v296 = vsub.s32 1, %v295
        %v297 = vrot.slane %v288, %v296
        %v310 = vunpack.c.l.b16 %v278
        %v311 = vunpack.c.h.b16 %v278
        %v312 = vunpack.c.l.b16 %v279
        %v313 = vunpack.c.h.b16 %v279
        %v314 = vunpack.c.l.b16 %v280
        %v315 = vunpack.c.h.b16 %v280
        %v316 = vunpack.c.l.b16 %v281
        %v317 = vunpack.c.h.b16 %v281
        %v318 = vunpack.c.l.b16 %v282
        %v319 = vunpack.c.h.b16 %v282
        %v320 = vunpack.c.l.b16 %v283
        %v321 = vunpack.c.h.b16 %v283
        %v322 = vunpack.c.l.b16 %v284
        %v323 = vunpack.c.h.b16 %v284
        %v324 = vunpack.c.l.b16 %v285
        %v325 = vunpack.c.h.b16 %v285
        %v326 = vunpack.c.l.b16 %v286
        %v327 = vunpack.c.h.b16 %v286
        %v328 = vunpack.c.l.b16 %v287
        %v329 = vunpack.c.h.b16 %v287
        %v330 = vpack.c.b16 %v312, %v310
        %v331 = vpack.c.b16 %v313, %v311
        %v332 = vpack.c.b16 %v316, %v314
        %v333 = vpack.c.b16 %v317, %v315
        %v334 = vpack.c.b16 %v320, %v318
        %v335 = vpack.c.b16 %v321, %v319
        %v336 = vpack.c.b16 %v324, %v322
        %v337 = vpack.c.b16 %v325, %v323
        %v338 = vpack.c.b16 %v328, %v326
        %v339 = vpack.c.b16 %v329, %v327
        %vm350 = vcmask 654336
        %v352 = vsel %vm350, %v277, 0
        %354 = vmatprep.subr.bf16.mxu0 %v331
        %355 = vmatpush1.bf16.msra.mxu0 %v330
        %356 = vmatprep.subr.bf16.mxu0 %v333
        %357 = vmatpush1.bf16.msra.mxu0 %v332
        %358 = vmatprep.subr.bf16.mxu0 %v335
        %359 = vmatpush1.bf16.msra.mxu0 %v334
        %360 = vmatprep.subr.bf16.mxu0 %v337
        %361 = vmatpush1.bf16.msra.mxu0 %v336
        %362 = vmatprep.subr.bf16.mxu0 %v339
        %363 = vmatpush1.bf16.msra.mxu0 %v338
        %364 = vmatprep.subr.bf16.mxu0 0
        %365 = vmatpush1.bf16.msra.mxu0 0
        %366 = vmatprep.subr.bf16.mxu0 0
        %367 = vmatpush1.bf16.msra.mxu0 0
        %368 = vmatprep.subr.bf16.mxu0 0
        %369 = vmatpush1.bf16.msra.mxu0 0
        %370 = vmatprep.subr.bf16.mxu0 0
        %371 = vmatpush1.bf16.msra.mxu0 0
        %372 = vmatprep.subr.bf16.mxu0 0
        %373 = vmatpush1.bf16.msra.mxu0 0
        %374 = vmatprep.subr.bf16.mxu0 0
        %375 = vmatpush1.bf16.msra.mxu0 0
        %376 = vmatprep.subr.bf16.mxu0 0
        %377 = vmatpush1.bf16.msra.mxu0 0
        %378 = vmatprep.subr.bf16.mxu0 0
        %379 = vmatpush1.bf16.msra.mxu0 0
        %380 = vmatprep.subr.bf16.mxu0 0
        %381 = vmatpush1.bf16.msra.mxu0 0
        %382 = vmatprep.subr.bf16.mxu0 0
        %383 = vmatpush1.bf16.msra.mxu0 0
        %384 = vmatprep.subr.bf16.mxu0 0
        %385 = vmatpush1.bf16.msra.mxu0 0
        %386 = vmatprep.mubr.bf16.mxu0 0
        %387 = vmatmul.mubr.bf16.gmra.mrb[0].mxu0 %v352
        %v388 = vpop.f32.mrb[0].mxu0
        %v389 = vadd.f32 %v293, %v388
        %v390 = vpop.f32.mrb[0].mxu0
        %v391 = vadd.f32 %v297, %v390
        %v392 = vpop.f32.mrb[0].mxu0
        %v393 = vadd.f32 %v293, %v392
        %v394 = vpop.f32.mrb[0].mxu0
        %v395 = vadd.f32 %v297, %v394
        %396 = vdwg.mxu0
        %v397 = vmax.f32 %v389, 0.0
        %v398 = vmax.f32 %v391, 0.0
        %v399 = vmax.f32 %v393, 0.0
        %v400 = vmax.f32 %v395, 0.0
        %v401 = vpack.c.bf16 %v399, %v397
        %v402 = vpack.c.bf16 %v400, %v398
        %v403 = vld [vmem:[#allocation7] sm:$0xff]
        %v404 = vld [vmem:[#allocation7 + $0x8] sm:$0xff]
        %v405 = vld [vmem:[#allocation7 + $0x10] sm:$0xff]
        %v406 = vld [vmem:[#allocation7 + $0x18] sm:$0xff]
        %v407 = vld [vmem:[#allocation7 + $0x20] sm:$0xff]
        %v408 = vld [vmem:[#allocation7 + $0x28] sm:$0xff]
        %v409 = vld [vmem:[#allocation7 + $0x30] sm:$0xff]
        %v410 = vld [vmem:[#allocation7 + $0x38] sm:$0xff]
        %v411 = vld [vmem:[#allocation7 + $0x40] sm:$0xff]
        %v412 = vld [vmem:[#allocation7 + $0x48] sm:$0xff]
        %v413 = vld [vmem:[#allocation7 + $0x50] sm:$0xff]
        %v414 = vld [vmem:[#allocation7 + $0x58] sm:$0xff]
        %v415 = vld [vmem:[#allocation7 + $0x60] sm:$0xff]
        %v416 = vld [vmem:[#allocation7 + $0x68] sm:$0xff]
        %v417 = vld [vmem:[#allocation7 + $0x70] sm:$0xff]
        %v418 = vld [vmem:[#allocation7 + $0x78] sm:$0xff]
        %v419 = vld [vmem:[#allocation7 + $0x80] sm:$0xff]
        %v420 = vld [vmem:[#allocation7 + $0x88] sm:$0xff]
        %v421 = vld [vmem:[#allocation7 + $0x90] sm:$0xff]
        %v422 = vld [vmem:[#allocation7 + $0x98] sm:$0xff]
        %v423 = vld [vmem:[#allocation7 + $0xa0] sm:$0xff]
        %v424 = vld [vmem:[#allocation7 + $0xa8] sm:$0xff]
        %v425 = vld [vmem:[#allocation7 + $0xb0] sm:$0xff]
        %v426 = vld [vmem:[#allocation7 + $0xb8] sm:$0xff]
        %v427 = vld [vmem:[#allocation7 + $0xc0] sm:$0xff]
        %v428 = vld [vmem:[#allocation7 + $0xc8] sm:$0xff]
        %v429 = vld [vmem:[#allocation7 + $0xd0] sm:$0xff]
        %v430 = vld [vmem:[#allocation7 + $0xd8] sm:$0xff]
        %v431 = vld [vmem:[#allocation7 + $0xe0] sm:$0xff]
        %v432 = vld [vmem:[#allocation7 + $0xe8] sm:$0xff]
        %v433 = vld [vmem:[#allocation7 + $0xf0] sm:$0xff]
        %v434 = vld [vmem:[#allocation7 + $0xf8] sm:$0xff]
        %v435 = vld [vmem:[%s4] sm:$0x3]
        %v437 = vlaneseq
        %v438 = vshrl.u32 %v437, 7
        %v439 = vsub.s32 0, %v438
        %v440 = vrot.slane %v435, %v439
        %v441 = vlaneseq
        %v442 = vshrl.u32 %v441, 7
        %v443 = vsub.s32 1, %v442
        %v444 = vrot.slane %v435, %v443
        %v479 = vunpack.c.l.b16 %v403
        %v480 = vunpack.c.h.b16 %v403
        %v481 = vunpack.c.l.b16 %v404
        %v482 = vunpack.c.h.b16 %v404
        %v483 = vunpack.c.l.b16 %v405
        %v484 = vunpack.c.h.b16 %v405
        %v485 = vunpack.c.l.b16 %v406
        %v486 = vunpack.c.h.b16 %v406
        %v487 = vunpack.c.l.b16 %v407
        %v488 = vunpack.c.h.b16 %v407
        %v489 = vunpack.c.l.b16 %v408
        %v490 = vunpack.c.h.b16 %v408
        %v491 = vunpack.c.l.b16 %v409
        %v492 = vunpack.c.h.b16 %v409
        %v493 = vunpack.c.l.b16 %v410
        %v494 = vunpack.c.h.b16 %v410
        %v495 = vunpack.c.l.b16 %v411
        %v496 = vunpack.c.h.b16 %v411
        %v497 = vunpack.c.l.b16 %v412
        %v498 = vunpack.c.h.b16 %v412
        %v499 = vunpack.c.l.b16 %v413
        %v500 = vunpack.c.h.b16 %v413
        %v501 = vunpack.c.l.b16 %v414
        %v502 = vunpack.c.h.b16 %v414
        %v503 = vunpack.c.l.b16 %v415
        %v504 = vunpack.c.h.b16 %v415
        %v505 = vunpack.c.l.b16 %v416
        %v506 = vunpack.c.h.b16 %v416
        %v507 = vunpack.c.l.b16 %v417
        %v508 = vunpack.c.h.b16 %v417
        %v509 = vunpack.c.l.b16 %v418
        %v510 = vunpack.c.h.b16 %v418
        %v511 = vunpack.c.l.b16 %v419
        %v512 = vunpack.c.h.b16 %v419
        %v513 = vunpack.c.l.b16 %v420
        %v514 = vunpack.c.h.b16 %v420
        %v515 = vunpack.c.l.b16 %v421
        %v516 = vunpack.c.h.b16 %v421
        %v517 = vunpack.c.l.b16 %v422
        %v518 = vunpack.c.h.b16 %v422
        %v519 = vunpack.c.l.b16 %v423
        %v520 = vunpack.c.h.b16 %v423
        %v521 = vunpack.c.l.b16 %v424
        %v522 = vunpack.c.h.b16 %v424
        %v523 = vunpack.c.l.b16 %v425
        %v524 = vunpack.c.h.b16 %v425
        %v525 = vunpack.c.l.b16 %v426
        %v526 = vunpack.c.h.b16 %v426
        %v527 = vunpack.c.l.b16 %v427
        %v528 = vunpack.c.h.b16 %v427
        %v529 = vunpack.c.l.b16 %v428
        %v530 = vunpack.c.h.b16 %v428
        %v531 = vunpack.c.l.b16 %v429
        %v532 = vunpack.c.h.b16 %v429
        %v533 = vunpack.c.l.b16 %v430
        %v534 = vunpack.c.h.b16 %v430
        %v535 = vunpack.c.l.b16 %v431
        %v536 = vunpack.c.h.b16 %v431
        %v537 = vunpack.c.l.b16 %v432
        %v538 = vunpack.c.h.b16 %v432
        %v539 = vunpack.c.l.b16 %v433
        %v540 = vunpack.c.h.b16 %v433
        %v541 = vunpack.c.l.b16 %v434
        %v542 = vunpack.c.h.b16 %v434
        %v543 = vpack.c.b16 %v481, %v479
        %v544 = vpack.c.b16 %v482, %v480
        %v545 = vpack.c.b16 %v485, %v483
        %v546 = vpack.c.b16 %v486, %v484
        %v547 = vpack.c.b16 %v489, %v487
        %v548 = vpack.c.b16 %v490, %v488
        %v549 = vpack.c.b16 %v493, %v491
        %v550 = vpack.c.b16 %v494, %v492
        %v551 = vpack.c.b16 %v497, %v495
        %v552 = vpack.c.b16 %v498, %v496
        %v553 = vpack.c.b16 %v501, %v499
        %v554 = vpack.c.b16 %v502, %v500
        %v555 = vpack.c.b16 %v505, %v503
        %v556 = vpack.c.b16 %v506, %v504
        %v557 = vpack.c.b16 %v509, %v507
        %v558 = vpack.c.b16 %v510, %v508
        %v559 = vpack.c.b16 %v513, %v511
        %v560 = vpack.c.b16 %v514, %v512
        %v561 = vpack.c.b16 %v517, %v515
        %v562 = vpack.c.b16 %v518, %v516
        %v563 = vpack.c.b16 %v521, %v519
        %v564 = vpack.c.b16 %v522, %v520
        %v565 = vpack.c.b16 %v525, %v523
        %v566 = vpack.c.b16 %v526, %v524
        %v567 = vpack.c.b16 %v529, %v527
        %v568 = vpack.c.b16 %v530, %v528
        %v569 = vpack.c.b16 %v533, %v531
        %v570 = vpack.c.b16 %v534, %v532
        %v571 = vpack.c.b16 %v537, %v535
        %v572 = vpack.c.b16 %v538, %v536
        %v573 = vpack.c.b16 %v541, %v539
        %v574 = vpack.c.b16 %v542, %v540
        %607 = vmatprep.subr.bf16.mxu0 %v544
        %608 = vmatpush1.bf16.msra.mxu0 %v543
        %609 = vmatprep.subr.bf16.mxu0 %v546
        %610 = vmatpush1.bf16.msra.mxu0 %v545
        %611 = vmatprep.subr.bf16.mxu0 %v548
        %612 = vmatpush1.bf16.msra.mxu0 %v547
        %613 = vmatprep.subr.bf16.mxu0 %v550
        %614 = vmatpush1.bf16.msra.mxu0 %v549
        %615 = vmatprep.subr.bf16.mxu0 %v552
        %616 = vmatpush1.bf16.msra.mxu0 %v551
        %617 = vmatprep.subr.bf16.mxu0 %v554
        %618 = vmatpush1.bf16.msra.mxu0 %v553
        %619 = vmatprep.subr.bf16.mxu0 %v556
        %620 = vmatpush1.bf16.msra.mxu0 %v555
        %621 = vmatprep.subr.bf16.mxu0 %v558
        %622 = vmatpush1.bf16.msra.mxu0 %v557
        %623 = vmatprep.subr.bf16.mxu0 %v560
        %624 = vmatpush1.bf16.msra.mxu0 %v559
        %625 = vmatprep.subr.bf16.mxu0 %v562
        %626 = vmatpush1.bf16.msra.mxu0 %v561
        %627 = vmatprep.subr.bf16.mxu0 %v564
        %628 = vmatpush1.bf16.msra.mxu0 %v563
        %629 = vmatprep.subr.bf16.mxu0 %v566
        %630 = vmatpush1.bf16.msra.mxu0 %v565
        %631 = vmatprep.subr.bf16.mxu0 %v568
        %632 = vmatpush1.bf16.msra.mxu0 %v567
        %633 = vmatprep.subr.bf16.mxu0 %v570
        %634 = vmatpush1.bf16.msra.mxu0 %v569
        %635 = vmatprep.subr.bf16.mxu0 %v572
        %636 = vmatpush1.bf16.msra.mxu0 %v571
        %637 = vmatprep.subr.bf16.mxu0 %v574
        %638 = vmatpush1.bf16.msra.mxu0 %v573
        %639 = vmatprep.mubr.bf16.mxu0 %v402
        %640 = vmatmul.mubr.bf16.gmra.mrb[0].mxu0 %v401
        %v641 = vpop.f32.mrb[0].mxu0
        %v642 = vadd.f32 %v440, %v641
        %v643 = vpop.f32.mrb[0].mxu0
        %v644 = vadd.f32 %v444, %v643
        %v645 = vpop.f32.mrb[0].mxu0
        %v646 = vadd.f32 %v440, %v645
        %v647 = vpop.f32.mrb[0].mxu0
        %v648 = vadd.f32 %v444, %v647
        %649 = vdwg.mxu0
        %v650 = vmax.f32 %v642, 0.0
        %v651 = vmax.f32 %v644, 0.0
        %v652 = vmax.f32 %v646, 0.0
        %v653 = vmax.f32 %v648, 0.0
        %654 = vst [vmem:[%s271] sm:$0xff] %v650
        %655 = vst [vmem:[%s271 + $0x8] sm:$0xff] %v651
        %656 = vst [vmem:[%s271 + $0x10] sm:$0xff] %v652
        %657 = vst [vmem:[%s271 + $0x18] sm:$0xff] %v653
        %s658 = sand.u32 %s141, 1
        %s659 = scalar_lea.sflag [#allocation4], %s658
        %s660 = sand.u32 %s141, 1
        %s661 = smul.addr %s660, 32
        %s662 = scalar_lea.vmem [#allocation8], %s661
        // Predicated region
        $region53: #{tpu_custom_call.1} parent=39 // pred_check
          %p663 = pneg %p151
        $region54: #{tpu_custom_call.1} parent=39 // pred_check_branch
          %665 = sbr.rel (%p663) target = $region56
        $region55: #{tpu_custom_call.1} parent=39 // pred_region
          %s666 = smul.u32 2, %s23
          %s668 = ssub.s32 512, 512
          %669 = vsyncadd %s659, %s668
          %s670 = smul.addr %s666, 2
          %s671 = smul.addr %s670, 128
          %s672 = scalar_lea.hbm %s5, %s671
          %s673 = sshll.u32 %s662, 4
          %s674 = int_to_ptr.vmem [resolvable:$true] %s673
          %679 = dma.vmem_to_hbm [thread:$0]  %s674, 512, %s672, %s659, 256, 256, 16
        $region56: #{tpu_custom_call.1} parent=39 // pred_fallthru
          _
      $region40: #{tpu_custom_call.1} parent=5 // pred_fallthru
        _
      %p680 = scmp.le.s32.totalorder 2, %s18
      // Predicated region
      $region57: #{tpu_custom_call.1} parent=5 // pred_check
        %p681 = pneg %p680
      $region58: #{tpu_custom_call.1} parent=5 // pred_check_branch
        %683 = sbr.rel (%p681) target = $region60
      $region59: #{tpu_custom_call.1} parent=5 // pred_region
        %s684 = ssub.s32 %s18, 2
        // Predicated region
        $region61: #{tpu_custom_call.1} parent=59 // pred_check
          %p685 = pneg %p157
        $region62: #{tpu_custom_call.1} parent=59 // pred_check_branch
          %687 = sbr.rel (%p685) target = $region64
        $region63: #{tpu_custom_call.1} parent=59 // pred_region
          %s688 = sand.u32 %s142, 1
          %s689 = scalar_lea.sflag [#allocation4], %s688
          %s690 = sand.u32 %s142, 1
          %s691 = smul.addr %s690, 32
          %s692 = scalar_lea.vmem [#allocation8], %s691
          %693 = dma.done %s689, 512
        $region64: #{tpu_custom_call.1} parent=59 // pred_fallthru
          _
      $region60: #{tpu_custom_call.1} parent=5 // pred_fallthru
        _
    $region6: #{tpu_custom_call.1} parent=1 // loop_footer
      %s22 = sadd.s32 1, %s18
    $region7: #{tpu_custom_call.1} parent=1 // loop_footer_branch
      %17 = sbr.rel target = $region3
    $region8: #{tpu_custom_call.1} parent=1 // loop_exit
      _
    %694 = vsyncpa [#allocation3], 1
    %s695 = scalar_lea.sflag [#allocation3], 1
    %696 = vsyncpa %s695, 1
    %697 = vsyncpa [#allocation6], 1
    %698 = vsyncpa [#allocation4], 1
    %s699 = scalar_lea.sflag [#allocation4], 1
    %700 = vsyncpa %s699, 1

</llo_original>
